<compile_context>
chip_gen: v7x
topology: tpu7x:2x2x1
jax: 0.10.0
libtpu: 0.0.40
codegen_flags: <defaults>
</compile_context>

<pallas_src>
import functools

import jax
import jax.numpy as jnp
from jax import lax
from jax.experimental import pallas as pl
from jax.experimental.pallas import tpu as pltpu


# --------------------------- kernel body ---------------------------------
def _style_kernel(x_ref, tgt_ref, gram_ref, loss_ref, acc_ref, *, inv_hw):
    k = pl.program_id(1)

    @pl.when(k == 0)
    def _():
        acc_ref[...] = jnp.zeros_like(acc_ref)

    # Partial Gram for this HW tile: (C, T) x (C, T)^T on the MXU, f32 acc.
    f = x_ref[0]  # native dtype (bf16/f32) straight into the MXU
    acc_ref[...] += lax.dot_general(
        f, f, (((1,), (1,)), ((), ())),
        preferred_element_type=jnp.float32)

    @pl.when(k == pl.num_programs(1) - 1)
    def _():
        g = acc_ref[...] * inv_hw                     # normalize once
        gram_ref[0] = g.astype(gram_ref.dtype)
        diff = g - tgt_ref[0].astype(jnp.float32)
        sq = jnp.sum(diff * diff)                     # per-batch SSE
        loss_ref[...] = jnp.full(loss_ref.shape, sq, dtype=loss_ref.dtype)


# --------------------------- tiling helpers -------------------------------
def _target_tile_bytes():
    """Per-generation VMEM budget for one x tile (double-buffered by Pallas)."""
    try:
        vmem = pltpu.get_tpu_info().vmem_capacity_bytes
    except Exception:
        vmem = 64 << 20  # assume the smallest (v7x) if query unavailable
    # ~1/16 of physical VMEM per tile: 4 MiB on v7x, 8 MiB on v5e/v6e.
    return int(max(1 << 20, min(vmem // 16, 8 << 20)))


def _choose_hw_tile(hw, c, dtype, target_bytes):
    """Largest lane-aligned HW tile that divides HW and fits the budget."""
    if hw % 128 != 0:
        return hw  # cannot tile cleanly; fall back to the full slab
    dsize = jnp.dtype(dtype).itemsize
    t = (target_bytes // max(c * dsize, 1)) // 128 * 128
    t = int(max(128, min(t, hw)))
    while hw % t != 0:
        t -= 128
    return max(t, 128)


# --------------------------- pallas_call wrapper ---------------------------
def gram_and_loss(x, target_gram):
    """Returns (gram (B, C, C) float32, scalar MSE loss vs target_gram)."""
    B, C, H, W = x.shape
    HW = H * W
    xf = x.reshape(B, C, HW)
    target_gram = target_gram.astype(jnp.float32)

    dsize = jnp.dtype(x.dtype).itemsize
    t_hw = _choose_hw_tile(HW, C, x.dtype, _target_tile_bytes())
    n_k = HW // t_hw

    kernel = functools.partial(_style_kernel, inv_hw=1.0 / float(HW))

    # Only raise the scoped-VMEM limit when the tiling actually needs it.
    x_tile_bytes = C * t_hw * dsize
    gram_bytes = C * C * 4
    need = 3 * x_tile_bytes + 8 * gram_bytes + (2 << 20)
    cp_kwargs = dict(dimension_semantics=("parallel", "arbitrary"))
    if need > (32 << 20):
        cp_kwargs["vmem_limit_bytes"] = int(min(need, 100 << 20))

    cost = pl.CostEstimate(
        flops=2 * B * C * C * HW,
        transcendentals=0,
        bytes_accessed=B * C * HW * dsize + 2 * B * C * C * 4 + B * 4,
    )

    gram, loss = pl.pallas_call(
        kernel,
        out_shape=(jax.ShapeDtypeStruct((B, C, C), jnp.float32),
                   jax.ShapeDtypeStruct((B, 1, 1), jnp.float32)),
        grid_spec=pltpu.PrefetchScalarGridSpec(
            num_scalar_prefetch=0,
            grid=(B, n_k),
            in_specs=[
                pl.BlockSpec((1, C, t_hw), lambda b, k: (b, 0, k)),
                pl.BlockSpec((1, C, C), lambda b, k: (b, 0, 0)),
            ],
            out_specs=[
                pl.BlockSpec((1, C, C), lambda b, k: (b, 0, 0)),
                pl.BlockSpec((1, 1, 1), lambda b, k: (b, 0, 0)),
            ],
            scratch_shapes=[pltpu.VMEM((C, C), jnp.float32)],
        ),
        compiler_params=pltpu.CompilerParams(**cp_kwargs),
        cost_estimate=cost,
    )(xf, target_gram)

    # Per-batch SSE -> global mean over (B, C, C), matching F.mse_loss.
    loss_scalar = jnp.sum(loss) / (B * C * C)
    return gram, loss_scalar


# --------------------------- module port -----------------------------------
class StyleLoss:
    """JAX/Pallas port of the PyTorch StyleLoss module."""

    def __init__(self, target_feature):
        B, C, _, _ = target_feature.shape
        zero_tgt = jnp.zeros((B, C, C), jnp.float32)
        tgt_gram, _ = gram_and_loss(target_feature, zero_tgt)
        self.target = jax.lax.stop_gradient(tgt_gram)  # .detach()

    def __call__(self, x):
        _, loss = gram_and_loss(x, self.target)
        self.loss = loss
        return x  # forward returns its input unchanged


# ---------------- reference (plain JAX) for verification ----------------
def _ref_gram(x):
    B, C, H, W = x.shape
    f = x.reshape(B, C, H * W).astype(jnp.float32)
    return jnp.einsum("bcn,bdn->bcd", f, f) / (H * W)


def _ref_style_loss(x, target_feature):
    g = _ref_gram(x)
    t = _ref_gram(target_feature)
    return jnp.mean((g - t) ** 2)


if __name__ == "__main__":
    key = jax.random.PRNGKey(0)
    k1, k2 = jax.random.split(key)
    B, C, H, W = 2, 4, 16, 16
    target_feature = jax.random.normal(k1, (B, C, H, W), jnp.float32)
    x = jax.random.normal(k2, (B, C, H, W), jnp.float32)

    module = StyleLoss(target_feature)
    out = module(x)
    loss = module.loss
    jax.block_until_ready(out)
    jax.block_until_ready(loss)

    ref_loss = _ref_style_loss(x, target_feature)
    assert out.shape == x.shape
    assert jnp.allclose(out, x)
    assert jnp.allclose(loss, ref_loss, rtol=1e-5, atol=1e-5), (loss, ref_loss)

    print("KERNEL_OK")
</pallas_src>

<mosaic_0001>
module attributes {stable_mosaic.version = 11 : i64} {
  func.func @_style_kernel(%arg0: i32, %arg1: i32, %arg2: memref<1x4x256xf32, #tpu.memory_space<vmem>>, %arg3: memref<1x4x4xf32, #tpu.memory_space<vmem>>, %arg4: memref<1x4x4xf32, #tpu.memory_space<vmem>>, %arg5: memref<1x1x1xf32, #tpu.memory_space<vmem>>, %arg6: memref<4x4xf32, #tpu.memory_space<vmem>>) attributes {dimension_semantics = [#tpu.dimension_semantics<parallel>, #tpu.dimension_semantics<arbitrary>], iteration_bounds = array<i64: 2, 1>, scalar_prefetch = 0 : i64, scratch_operands = 1 : i64, tpu.core_type = #tpu.core_type<tc>, window_params = [{transform_indices = @transform_0, window_bounds = array<i64: 1, 4, 256>}, {transform_indices = @transform_1, window_bounds = array<i64: 1, 4, 4>}, {transform_indices = @transform_2, window_bounds = array<i64: 1, 4, 4>}, {transform_indices = @transform_3, window_bounds = array<i64: 1, 1, 1>}]} {
    %c0_i32 = arith.constant 0 : i32
    %0 = arith.cmpi eq, %arg1, %c0_i32 : i32
    %1 = arith.extui %0 : i1 to i32
    %c0_i32_0 = arith.constant 0 : i32
    %2 = arith.cmpi ne, %1, %c0_i32_0 : i32
    scf.if %2 {
      %cst_9 = arith.constant 0.000000e+00 : f32
      %12 = vector.broadcast %cst_9 : f32 to vector<4x4xf32>
      %c0_10 = arith.constant 0 : index
      %c0_11 = arith.constant 0 : index
      %13 = vector.load %arg6[%c0_10, %c0_11] : memref<4x4xf32, #tpu.memory_space<vmem>>, vector<4x4xf32>
      tpu.vector_store %arg6[%c0_10, %c0_11], %12 {strides = array<i32>} : memref<4x4xf32, #tpu.memory_space<vmem>>, vector<4x4xf32>,
    } else {
    }
    %c0 = arith.constant 0 : index
    %c0_1 = arith.constant 0 : index
    %c0_2 = arith.constant 0 : index
    %3 = vector.load %arg2[%c0, %c0_1, %c0_2] : memref<1x4x256xf32, #tpu.memory_space<vmem>>, vector<1x4x256xf32>
    %4 = vector.shape_cast %3 : vector<1x4x256xf32> to vector<4x256xf32>
    %c0_3 = arith.constant 0 : index
    %c0_4 = arith.constant 0 : index
    %5 = vector.load %arg6[%c0_3, %c0_4] : memref<4x4xf32, #tpu.memory_space<vmem>>, vector<4x4xf32>
    %cst = arith.constant dense<0.000000e+00> : vector<4x4xf32>
    %6 = tpu.matmul %4, %4, %cst {dimension_numbers = #tpu.dot_dimension_numbers<[1], [1], [0], [0], [0, 0, 1, 0], [], []>} : vector<4x256xf32>, vector<4x256xf32>, vector<4x4xf32> -> vector<4x4xf32>
    %7 = arith.addf %5, %6 : vector<4x4xf32>
    %c0_5 = arith.constant 0 : index
    %c0_6 = arith.constant 0 : index
    %8 = vector.load %arg6[%c0_5, %c0_6] : memref<4x4xf32, #tpu.memory_space<vmem>>, vector<4x4xf32>
    tpu.vector_store %arg6[%c0_5, %c0_6], %7 {strides = array<i32>} : memref<4x4xf32, #tpu.memory_space<vmem>>, vector<4x4xf32>,
    %c0_i32_7 = arith.constant 0 : i32
    %9 = arith.cmpi eq, %arg1, %c0_i32_7 : i32
    %10 = arith.extui %9 : i1 to i32
    %c0_i32_8 = arith.constant 0 : i32
    %11 = arith.cmpi ne, %10, %c0_i32_8 : i32
    scf.if %11 {
      %c0_9 = arith.constant 0 : index
      %c0_10 = arith.constant 0 : index
      %12 = vector.load %arg6[%c0_9, %c0_10] : memref<4x4xf32, #tpu.memory_space<vmem>>, vector<4x4xf32>
      %cst_11 = arith.constant 3.906250e-03 : f32
      %13 = vector.broadcast %cst_11 : f32 to vector<4x4xf32>
      %14 = arith.mulf %12, %13 : vector<4x4xf32>
      %c0_12 = arith.constant 0 : index
      %c0_13 = arith.constant 0 : index
      %c0_14 = arith.constant 0 : index
      %15 = vector.load %arg4[%c0_12, %c0_13, %c0_14] : memref<1x4x4xf32, #tpu.memory_space<vmem>>, vector<1x4x4xf32>
      %16 = vector.shape_cast %15 : vector<1x4x4xf32> to vector<4x4xf32>
      %17 = vector.shape_cast %14 : vector<4x4xf32> to vector<1x4x4xf32>
      tpu.vector_store %arg4[%c0_12, %c0_13, %c0_14], %17 {strides = array<i32>} : memref<1x4x4xf32, #tpu.memory_space<vmem>>, vector<1x4x4xf32>,
      %c0_15 = arith.constant 0 : index
      %c0_16 = arith.constant 0 : index
      %c0_17 = arith.constant 0 : index
      %18 = vector.load %arg3[%c0_15, %c0_16, %c0_17] : memref<1x4x4xf32, #tpu.memory_space<vmem>>, vector<1x4x4xf32>
      %19 = vector.shape_cast %18 : vector<1x4x4xf32> to vector<4x4xf32>
      %20 = arith.subf %14, %19 : vector<4x4xf32>
      %21 = arith.mulf %20, %20 : vector<4x4xf32>
      %22 = vector.shape_cast %21 : vector<4x4xf32> to vector<1x4x4xf32>
      %cst_18 = arith.constant dense<0.000000e+00> : vector<1xf32>
      %23 = vector.multi_reduction <add>, %22, %cst_18 [1, 2] : vector<1x4x4xf32> to vector<1xf32>
      %24 = vector.shape_cast %23 : vector<1xf32> to vector<1x1x1xf32>
      %25 = vector.extract %24[0, 0, 0] : f32 from vector<1x1x1xf32>
      %26 = vector.broadcast %25 : f32 to vector<1x1x1xf32>
      %c0_19 = arith.constant 0 : index
      %c0_20 = arith.constant 0 : index
      %c0_21 = arith.constant 0 : index
      %27 = vector.load %arg5[%c0_19, %c0_20, %c0_21] : memref<1x1x1xf32, #tpu.memory_space<vmem>>, vector<1x1x1xf32>
      tpu.vector_store %arg5[%c0_19, %c0_20, %c0_21], %26 {strides = array<i32>} : memref<1x1x1xf32, #tpu.memory_space<vmem>>, vector<1x1x1xf32>,
    } else {
    }
    return
  }
  func.func @transform_0(%arg0: i32, %arg1: i32) -> (i32, i32, i32) {
    %c0_i32 = arith.constant 0 : i32
    %c0_i32_0 = arith.constant 0 : i32
    return %arg0, %c0_i32, %arg1 : i32, i32, i32
  }
  func.func @transform_1(%arg0: i32, %arg1: i32) -> (i32, i32, i32) {
    %c0_i32 = arith.constant 0 : i32
    %c0_i32_0 = arith.constant 0 : i32
    %c0_i32_1 = arith.constant 0 : i32
    return %arg0, %c0_i32, %c0_i32_0 : i32, i32, i32
  }
  func.func @transform_2(%arg0: i32, %arg1: i32) -> (i32, i32, i32) {
    %c0_i32 = arith.constant 0 : i32
    %c0_i32_0 = arith.constant 0 : i32
    %c0_i32_1 = arith.constant 0 : i32
    return %arg0, %c0_i32, %c0_i32_0 : i32, i32, i32
  }
  func.func @transform_3(%arg0: i32, %arg1: i32) -> (i32, i32, i32) {
    %c0_i32 = arith.constant 0 : i32
    %c0_i32_0 = arith.constant 0 : i32
    %c0_i32_1 = arith.constant 0 : i32
    return %arg0, %c0_i32, %c0_i32_0 : i32, i32, i32
  }
}

</mosaic_0001>

<llo_original>
// kernel: tpu_custom_call.1
$region0: #{tpu_custom_call.1}
  #allocation0 [shape = 'u32[]', space=smem, size = 0x4, offset = 0x4, fixed_abs, tag = 'smem constant byte address 0x4 - core index']
  #allocation1 [shape = 'u32[144,128]{1,0:T(1,128)}', space=vmem, size = 0x12000, scoped, tag = 'internal scratch']
  #allocation2 [shape = 'f32[4,4]{1,0:T(4,128)}', space=vmem, size = 0x800, scoped, tag = 'scratch operand']
  %s0 = inlined_call_operand.hbm [shape: f32[2,4,256], index: 0, kind: input, shape index: {}]
  %s1 = inlined_call_operand.hbm [shape: f32[2,4,4], index: 1, kind: input, shape index: {}]
  %s2 = inlined_call_operand.hbm [shape: f32[2,4,4], index: 2, kind: output, shape index: {0}]
  %s3 = inlined_call_operand.vmem [shape: f32[2,1,1], index: 3, kind: output, shape index: {1}]
  %4 = xla_tuple %s2, %s3
  %s5 = sld [smem:[#allocation0]]
  $region65: #{tpu_custom_call.1} parent=0
    _
  %s7 = ssub.s32 1, %s5
  %s8 = scalar_select 0, %s7, %s5
  $region1: #{tpu_custom_call.1} parent=0
    #allocation3 [shape = 'u8[8192]{0}', space=vmem, size = 0x2000, scoped, tag = 'input window, operand 0']
    #allocation4 [shape = 's32[2]{0}', space=sflag, size = 0x8, scoped, tag = 'scoped memory for tpu_custom_call.1']
    #allocation5 [shape = 's32[2]{0}', space=sflag, size = 0x8, scoped, tag = 'scoped memory for tpu_custom_call.1']
    #allocation6 [shape = 'u8[4096]{0}', space=vmem, size = 0x1000, scoped, tag = 'input window, operand 1']
    #allocation7 [shape = 's32[2]{0}', space=sflag, size = 0x8, scoped, tag = 'scoped memory for tpu_custom_call.1']
    #allocation8 [shape = 'u8[4096]{0}', space=vmem, size = 0x1000, scoped, tag = 'output window, operand 0']
    %9 = vsyncpa [#allocation4], 0
    %s10 = scalar_lea.sflag [#allocation4], 1
    %11 = vsyncpa %s10, 0
    %12 = vsyncpa [#allocation7], 0
    %s13 = scalar_lea.sflag [#allocation7], 1
    %14 = vsyncpa %s13, 0
    %15 = vsyncpa [#allocation5], 0
    %s16 = scalar_lea.sflag [#allocation5], 1
    %17 = vsyncpa %s16, 0
    loop: start=0, step=1, limit=4
    $region2: #{tpu_custom_call.1} parent=1 // loop_pre_header
      _
    $region3: #{tpu_custom_call.1} parent=1 // loop_header
      %s19 = sphi 0, %s23
      %p20 = scmp.ge.s32.totalorder %s19, 4
      %s26 = sphi 0, %s38
      %s27 = sphi 0, %s34
      %s28 = sphi 0, %s26
      %s29 = sphi 0, %s27
      %s30 = sphi 0, %s28
      %s31 = sphi 0, %s29
      %s43 = sphi 0, %s45
      %s46 = sphi 0, %s43
      %s47 = sphi 0, %s46
      %s63 = sphi 0, %s47
      %s69 = sphi 0, %s71
      %s72 = sphi 0, %s69
      %s73 = sphi 0, %s72
      %s89 = sphi 0, %s73
      %s95 = sphi 0, %s97
      %s98 = sphi 0, %s95
      %s99 = sphi 0, %s98
      %s115 = sphi 0, %s99
      %s121 = sphi 0, %s123
      %s124 = sphi 0, %s121
      %s125 = sphi 0, %s124
      %s141 = sphi 0, %s125
    $region4: #{tpu_custom_call.1} parent=1 // loop_header_branch
      %22 = sbr.rel (%p20) target = $region8
    $region5: #{tpu_custom_call.1} parent=1 // loop_body
      %s24 = ssub.s32 %s19, 1
      %s25 = ssub.s32 %s19, 2
      %s32 = sadd.s32 1, %s27
      %p33 = scmp.ge.s32.totalorder %s32, 1
      %s34 = scalar_select %p33, 0, %s32
      %s35 = sadd.s32 1, %s26
      %s36 = scalar_select %p33, %s35, %s26
      %p37 = scmp.ge.s32.totalorder %s36, 2
      %s38 = scalar_select %p37, 0, %s36
      %s39 = ssub.s32 %s26, %s38
      %s40 = ssub.s32 %s27, %s34
      %s41 = sor.u32 %s39, %s40
      %p42 = scmp.eq.s32.totalorder %s41, 0
      %s44 = sadd.s32 %s43, 1
      %s45 = scalar_select %p42, %s43, %s44
      %p48 = pneg %p42
      %p49 = scmp.eq.s32.totalorder %s19, 1
      %p50 = por %p48, %p49
      %p51 = scmp.ne.s32.totalorder %s43, %s46
      %p52 = scmp.eq.s32.totalorder %s19, 0
      %p53 = por %p51, %p52
      %p54 = scmp.ne.s32.totalorder %s43, %s46
      %p55 = scmp.eq.s32.totalorder %s24, 1
      %p56 = por %p54, %p55
      %p57 = scmp.ne.s32.totalorder %s46, %s47
      %p58 = scmp.eq.s32.totalorder %s24, 0
      %p59 = por %p57, %p58
      %p60 = scmp.ne.s32.totalorder %s46, %s47
      %p61 = scmp.eq.s32.totalorder %s25, 1
      %p62 = por %p60, %p61
      %p64 = scmp.ne.s32.totalorder %s47, %s63
      %p65 = scmp.eq.s32.totalorder %s25, 0
      %p66 = por %p64, %p65
      %s67 = ssub.s32 %s26, %s38
      %p68 = scmp.eq.s32.totalorder %s67, 0
      %s70 = sadd.s32 %s69, 1
      %s71 = scalar_select %p68, %s69, %s70
      %p74 = pneg %p68
      %p75 = scmp.eq.s32.totalorder %s19, 1
      %p76 = por %p74, %p75
      %p77 = scmp.ne.s32.totalorder %s69, %s72
      %p78 = scmp.eq.s32.totalorder %s19, 0
      %p79 = por %p77, %p78
      %p80 = scmp.ne.s32.totalorder %s69, %s72
      %p81 = scmp.eq.s32.totalorder %s24, 1
      %p82 = por %p80, %p81
      %p83 = scmp.ne.s32.totalorder %s72, %s73
      %p84 = scmp.eq.s32.totalorder %s24, 0
      %p85 = por %p83, %p84
      %p86 = scmp.ne.s32.totalorder %s72, %s73
      %p87 = scmp.eq.s32.totalorder %s25, 1
      %p88 = por %p86, %p87
      %p90 = scmp.ne.s32.totalorder %s73, %s89
      %p91 = scmp.eq.s32.totalorder %s25, 0
      %p92 = por %p90, %p91
      %s93 = ssub.s32 %s26, %s38
      %p94 = scmp.eq.s32.totalorder %s93, 0
      %s96 = sadd.s32 %s95, 1
      %s97 = scalar_select %p94, %s95, %s96
      %p100 = pneg %p94
      %p101 = scmp.eq.s32.totalorder %s19, 1
      %p102 = por %p100, %p101
      %p103 = scmp.ne.s32.totalorder %s95, %s98
      %p104 = scmp.eq.s32.totalorder %s19, 0
      %p105 = por %p103, %p104
      %p106 = scmp.ne.s32.totalorder %s95, %s98
      %p107 = scmp.eq.s32.totalorder %s24, 1
      %p108 = por %p106, %p107
      %p109 = scmp.ne.s32.totalorder %s98, %s99
      %p110 = scmp.eq.s32.totalorder %s24, 0
      %p111 = por %p109, %p110
      %p112 = scmp.ne.s32.totalorder %s98, %s99
      %p113 = scmp.eq.s32.totalorder %s25, 1
      %p114 = por %p112, %p113
      %p116 = scmp.ne.s32.totalorder %s99, %s115
      %p117 = scmp.eq.s32.totalorder %s25, 0
      %p118 = por %p116, %p117
      %s119 = ssub.s32 %s26, %s38
      %p120 = scmp.eq.s32.totalorder %s119, 0
      %s122 = sadd.s32 %s121, 1
      %s123 = scalar_select %p120, %s121, %s122
      %p126 = pneg %p120
      %p127 = scmp.eq.s32.totalorder %s19, 1
      %p128 = por %p126, %p127
      %p129 = scmp.ne.s32.totalorder %s121, %s124
      %p130 = scmp.eq.s32.totalorder %s19, 0
      %p131 = por %p129, %p130
      %p132 = scmp.ne.s32.totalorder %s121, %s124
      %p133 = scmp.eq.s32.totalorder %s24, 1
      %p134 = por %p132, %p133
      %p135 = scmp.ne.s32.totalorder %s124, %s125
      %p136 = scmp.eq.s32.totalorder %s24, 0
      %p137 = por %p135, %p136
      %p138 = scmp.ne.s32.totalorder %s124, %s125
      %p139 = scmp.eq.s32.totalorder %s25, 1
      %p140 = por %p138, %p139
      %p142 = scmp.ne.s32.totalorder %s125, %s141
      %p143 = scmp.eq.s32.totalorder %s25, 0
      %p144 = por %p142, %p143
      %p145 = scmp.le.s32.totalorder 1, %s19
      %p146 = scmp.lt.s32.totalorder %s19, 3
      %p147 = pnand %p145, %p146
      %p148 = pneg %p147
      // Predicated region
      $region9: #{tpu_custom_call.1} parent=5 // pred_check
        _
      $region10: #{tpu_custom_call.1} parent=5 // pred_check_branch
        %150 = sbr.rel (%p147) target = $region12
      $region11: #{tpu_custom_call.1} parent=5 // pred_region
        %s151 = ssub.s32 %s19, 1
      $region12: #{tpu_custom_call.1} parent=5 // pred_fallthru
        _
      %p152 = scmp.lt.s32.totalorder %s19, 2
      // Predicated region
      $region13: #{tpu_custom_call.1} parent=5 // pred_check
        %p153 = pneg %p152
      $region14: #{tpu_custom_call.1} parent=5 // pred_check_branch
        %155 = sbr.rel (%p153) target = $region16
      $region15: #{tpu_custom_call.1} parent=5 // pred_region
        // Predicated region
        $region17: #{tpu_custom_call.1} parent=15 // pred_check
          %p156 = pneg %p53
        $region18: #{tpu_custom_call.1} parent=15 // pred_check_branch
          %158 = sbr.rel (%p156) target = $region20
        $region19: #{tpu_custom_call.1} parent=15 // pred_region
          %s159 = sand.u32 %s43, 1
          %s160 = scalar_lea.sflag [#allocation4], %s159
          %s161 = sand.u32 %s43, 1
          %s162 = smul.addr %s161, 8
          %s163 = scalar_lea.vmem [#allocation3], %s162
          %s164 = smul.u32 2, %s27
          %s166 = ssub.s32 128, 128
          %167 = vsyncadd %s160, %s166
          %s168 = smul.addr %s26, 2
          %s169 = sadd.s32 %s164, %s168
          %s170 = smul.addr %s169, 64
          %s171 = scalar_lea.hbm %s0, %s170
          %s173 = sshll.u32 %s163, 4
          %s174 = int_to_ptr.vmem [resolvable:$true] %s173
          %176 = dma.hbm_to_vmem [thread:$0]  %s171, 128, %s174, %s160
        $region20: #{tpu_custom_call.1} parent=15 // pred_fallthru
          _
        // Predicated region
        $region21: #{tpu_custom_call.1} parent=15 // pred_check
          %p177 = pneg %p79
        $region22: #{tpu_custom_call.1} parent=15 // pred_check_branch
          %179 = sbr.rel (%p177) target = $region24
        $region23: #{tpu_custom_call.1} parent=15 // pred_region
          %s180 = sand.u32 %s69, 1
          %s181 = scalar_lea.sflag [#allocation7], %s180
          %s182 = sand.u32 %s69, 1
          %s183 = smul.addr %s182, 4
          %s184 = scalar_lea.vmem [#allocation6], %s183
          %s186 = ssub.s32 64, 64
          %187 = vsyncadd %s181, %s186
          %s188 = smul.addr %s26, 64
          %s189 = scalar_lea.hbm %s1, %s188
          %s191 = sshll.u32 %s184, 4
          %s192 = int_to_ptr.vmem [resolvable:$true] %s191
          %194 = dma.hbm_to_vmem [thread:$0]  %s189, 64, %s192, %s181
        $region24: #{tpu_custom_call.1} parent=15 // pred_fallthru
          _
      $region16: #{tpu_custom_call.1} parent=5 // pred_fallthru
        _
      %p195 = scmp.le.s32.totalorder 1, %s19
      %p196 = scmp.lt.s32.totalorder %s19, 3
      %p197 = pnand %p195, %p196
      %p198 = pneg %p197
      // Predicated region
      $region25: #{tpu_custom_call.1} parent=5 // pred_check
        _
      $region26: #{tpu_custom_call.1} parent=5 // pred_check_branch
        %200 = sbr.rel (%p197) target = $region28
      $region27: #{tpu_custom_call.1} parent=5 // pred_region
        %s201 = ssub.s32 %s19, 1
        %s202 = sand.u32 %s46, 1
        %s203 = scalar_lea.sflag [#allocation4], %s202
        %s204 = sand.u32 %s46, 1
        %s205 = smul.addr %s204, 8
        %s206 = scalar_lea.vmem [#allocation3], %s205
        // Predicated region
        $region29: #{tpu_custom_call.1} parent=27 // pred_check
          %p207 = pneg %p59
        $region30: #{tpu_custom_call.1} parent=27 // pred_check_branch
          %209 = sbr.rel (%p207) target = $region32
        $region31: #{tpu_custom_call.1} parent=27 // pred_region
          %210 = dma.done %s203, 128
        $region32: #{tpu_custom_call.1} parent=27 // pred_fallthru
          _
        %s211 = sand.u32 %s72, 1
        %s212 = scalar_lea.sflag [#allocation7], %s211
        %s213 = sand.u32 %s72, 1
        %s214 = smul.addr %s213, 4
        %s215 = scalar_lea.vmem [#allocation6], %s214
        // Predicated region
        $region33: #{tpu_custom_call.1} parent=27 // pred_check
          %p216 = pneg %p85
        $region34: #{tpu_custom_call.1} parent=27 // pred_check_branch
          %218 = sbr.rel (%p216) target = $region36
        $region35: #{tpu_custom_call.1} parent=27 // pred_region
          %219 = dma.done %s212, 64
        $region36: #{tpu_custom_call.1} parent=27 // pred_fallthru
          _
        %s220 = sand.u32 %s46, 1
        %s221 = scalar_lea.sflag [#allocation4], %s220
        %s222 = sand.u32 %s46, 1
        %s223 = smul.addr %s222, 8
        %s224 = scalar_lea.vmem [#allocation3], %s223
        %p225 = pneg %p59
        %p226 = pneg %p56
        %s227 = sand.u32 %s72, 1
        %s228 = scalar_lea.sflag [#allocation7], %s227
        %s229 = sand.u32 %s72, 1
        %s230 = smul.addr %s229, 4
        %s231 = scalar_lea.vmem [#allocation6], %s230
        %p232 = pneg %p85
        %p233 = pneg %p82
        %p234 = pneg %p111
        %p235 = pneg %p108
        %s236 = sand.u32 %s98, 1
        %s237 = scalar_lea.sflag [#allocation5], %s236
        %s238 = sand.u32 %s98, 1
        %s239 = smul.addr %s238, 4
        %s240 = scalar_lea.vmem [#allocation8], %s239
        %p241 = pneg %p137
        %p242 = pneg %p134
        %p243 = scmp.lt.s32.totalorder %s28, 1
        %s244 = scalar_select %p243, %s28, 1
        %s245 = scalar_lea.vmem %s3, %s244
        %s246 = smul.u32 2, %s29
        %p247 = scmp.lt.s32.totalorder %s28, 1
        %s248 = scalar_select %p247, %s28, 1
        %s249 = scalar_lea.vmem %s3, %s248
        %p250 = scmp.eq.s32.totalorder %s29, 0
        // Predicated region
        $region37: #{tpu_custom_call.1} parent=27 // pred_check
          %p251 = pneg %p250
        $region38: #{tpu_custom_call.1} parent=27 // pred_check_branch
          %253 = sbr.rel (%p251) target = $region40
        $region39: #{tpu_custom_call.1} parent=27 // pred_region
          %vm254 = vcmask 27648
          %255 = vst.msk [vmem:[#allocation2] sm:$0xf] %vm254, 0.0
        $region40: #{tpu_custom_call.1} parent=27 // pred_fallthru
          _
        %v256 = vld [vmem:[%s206] sm:$0xff]
        %v257 = vld [vmem:[#allocation2] sm:$0xf]
        %v259 = vcombine.high %v256, %v256
        %261 = vmatprep.subr.mxu0 %v259
        %262 = vmatpush1.xpose.msra.mxu0 %v256
        %263 = vmatprep.subr.mxu0 0.0
        %264 = vmatpush1.xpose.msra.mxu0 0.0
        %265 = vmatprep.subr.mxu0 0.0
        %266 = vmatpush1.xpose.msra.mxu0 0.0
        %267 = vmatprep.subr.mxu0 0.0
        %268 = vmatpush1.xpose.msra.mxu0 0.0
        %269 = vmatprep.subr.mxu0 0.0
        %270 = vmatpush1.xpose.msra.mxu0 0.0
        %271 = vmatprep.subr.mxu0 0.0
        %272 = vmatpush1.xpose.msra.mxu0 0.0
        %273 = vmatprep.subr.mxu0 0.0
        %274 = vmatpush1.xpose.msra.mxu0 0.0
        %275 = vmatprep.subr.mxu0 0.0
        %276 = vmatpush1.xpose.msra.mxu0 0.0
        %277 = vmatprep.subr.mxu0 0.0
        %278 = vmatpush1.xpose.msra.mxu0 0.0
        %279 = vmatprep.subr.mxu0 0.0
        %280 = vmatpush1.xpose.msra.mxu0 0.0
        %281 = vmatprep.subr.mxu0 0.0
        %282 = vmatpush1.xpose.msra.mxu0 0.0
        %283 = vmatprep.subr.mxu0 0.0
        %284 = vmatpush1.xpose.msra.mxu0 0.0
        %285 = vmatprep.subr.mxu0 0.0
        %286 = vmatpush1.xpose.msra.mxu0 0.0
        %287 = vmatprep.subr.mxu0 0.0
        %288 = vmatpush1.xpose.msra.mxu0 0.0
        %289 = vmatprep.subr.mxu0 0.0
        %290 = vmatpush1.xpose.msra.mxu0 0.0
        %291 = vmatprep.subr.mxu0 0.0
        %292 = vmatpush1.xpose.msra.mxu0 0.0
        %293 = vmatprep.subr.mxu0 0.0
        %294 = vmatpush1.xpose.msra.mxu0 0.0
        %295 = vmatprep.subr.mxu0 0.0
        %296 = vmatpush1.xpose.msra.mxu0 0.0
        %297 = vmatprep.subr.mxu0 0.0
        %298 = vmatpush1.xpose.msra.mxu0 0.0
        %299 = vmatprep.subr.mxu0 0.0
        %300 = vmatpush1.xpose.msra.mxu0 0.0
        %301 = vmatprep.subr.mxu0 0.0
        %302 = vmatpush1.xpose.msra.mxu0 0.0
        %303 = vmatprep.subr.mxu0 0.0
        %304 = vmatpush1.xpose.msra.mxu0 0.0
        %305 = vmatprep.subr.mxu0 0.0
        %306 = vmatpush1.xpose.msra.mxu0 0.0
        %307 = vmatprep.subr.mxu0 0.0
        %308 = vmatpush1.xpose.msra.mxu0 0.0
        %309 = vmatprep.subr.mxu0 0.0
        %310 = vmatpush1.xpose.msra.mxu0 0.0
        %311 = vmatprep.subr.mxu0 0.0
        %312 = vmatpush1.xpose.msra.mxu0 0.0
        %313 = vmatprep.subr.mxu0 0.0
        %314 = vmatpush1.xpose.msra.mxu0 0.0
        %315 = vmatprep.subr.mxu0 0.0
        %316 = vmatpush1.xpose.msra.mxu0 0.0
        %317 = vmatprep.subr.mxu0 0.0
        %318 = vmatpush1.xpose.msra.mxu0 0.0
        %319 = vmatprep.subr.mxu0 0.0
        %320 = vmatpush1.xpose.msra.mxu0 0.0
        %321 = vmatprep.subr.mxu0 0.0
        %322 = vmatpush1.xpose.msra.mxu0 0.0
        %323 = vmatprep.subr.mxu0 0.0
        %324 = vmatpush1.xpose.msra.mxu0 0.0
        %325 = vmatprep.mubr.f32.mxu0 %v259
        %326 = vmatmul.mubr.f32.gmra.mrb[0].mxu0 %v256
        %v327 = vpop.f32.mrb[0].mxu0
        %v328 = vadd.f32 0.0, %v327
        %v329 = vpop.f32.mrb[0].mxu0
        %330 = vdwg.mxu0
        %v331 = vadd.f32 %v257, %v328
        %vm332 = vcmask 27648
        %333 = vst.msk [vmem:[#allocation2] sm:$0xf] %vm332, %v331
        // Predicated region
        $region41: #{tpu_custom_call.1} parent=27 // pred_check
          %p334 = pneg %p250
        $region42: #{tpu_custom_call.1} parent=27 // pred_check_branch
          %336 = sbr.rel (%p334) target = $region44
        $region43: #{tpu_custom_call.1} parent=27 // pred_region
          %v337 = vld [vmem:[#allocation2] sm:$0xf]
          %v338 = vmul.f32 %v337, 0.00390625
          %339 = vst.msk [vmem:[%s240] sm:$0xf] %vm332, %v338
          %v340 = vld [vmem:[%s215] sm:$0xf]
          %v341 = vsub.f32 %v338, %v340
          %v342 = vmul.f32 %v341, %v341
          %v343 = vsel %vm332, %v342, 0.0
          %344 = vadd.xlane.f32.xlu0 %v343
          %v345 = vpop.xlane.xlu0 %344
          %v346 = vrot.slane %v345, 4
          %v347 = vadd.f32 %v345, %v346
          %v348 = vrot.slane %v347, 2
          %v349 = vadd.f32 %v347, %v348
          %v350 = vrot.slane %v349, 1
          %v351 = vadd.f32 %v349, %v350
          %s352 = vtos %v351
          %v353 = vstv %s352
          %vm354 = vcmask 0
          %355 = vst.msk [vmem:[%s249] sm:$0x1] %vm354, %v353
        $region44: #{tpu_custom_call.1} parent=27 // pred_fallthru
          _
        %s356 = sand.u32 %s98, 1
        %s357 = scalar_lea.sflag [#allocation5], %s356
        %s358 = sand.u32 %s98, 1
        %s359 = smul.addr %s358, 4
        %s360 = scalar_lea.vmem [#allocation8], %s359
        %p361 = scmp.lt.s32.totalorder %s28, 1
        %s362 = scalar_select %p361, %s28, 1
        %s363 = scalar_lea.vmem %s3, %s362
        // Predicated region
        $region45: #{tpu_custom_call.1} parent=27 // pred_check
          %p364 = pneg %p108
        $region46: #{tpu_custom_call.1} parent=27 // pred_check_branch
          %366 = sbr.rel (%p364) target = $region48
        $region47: #{tpu_custom_call.1} parent=27 // pred_region
          %s368 = ssub.s32 64, 64
          %369 = vsyncadd %s357, %s368
          %s370 = smul.addr %s28, 64
          %s371 = scalar_lea.hbm %s2, %s370
          %s373 = sshll.u32 %s360, 4
          %s374 = int_to_ptr.vmem [resolvable:$true] %s373
          %376 = dma.vmem_to_hbm [thread:$0]  %s374, 64, %s371, %s357
        $region48: #{tpu_custom_call.1} parent=27 // pred_fallthru
          _
        // Predicated region
        $region49: #{tpu_custom_call.1} parent=27 // pred_check
          %p377 = pneg %p134
        $region50: #{tpu_custom_call.1} parent=27 // pred_check_branch
          %379 = sbr.rel (%p377) target = $region52
        $region51: #{tpu_custom_call.1} parent=27 // pred_region
          _
        $region52: #{tpu_custom_call.1} parent=27 // pred_fallthru
          _
      $region28: #{tpu_custom_call.1} parent=5 // pred_fallthru
        _
      %p380 = scmp.le.s32.totalorder 2, %s19
      // Predicated region
      $region53: #{tpu_custom_call.1} parent=5 // pred_check
        %p381 = pneg %p380
      $region54: #{tpu_custom_call.1} parent=5 // pred_check_branch
        %383 = sbr.rel (%p381) target = $region56
      $region55: #{tpu_custom_call.1} parent=5 // pred_region
        %s384 = ssub.s32 %s19, 2
        // Predicated region
        $region57: #{tpu_custom_call.1} parent=55 // pred_check
          %p385 = pneg %p114
        $region58: #{tpu_custom_call.1} parent=55 // pred_check_branch
          %387 = sbr.rel (%p385) target = $region60
        $region59: #{tpu_custom_call.1} parent=55 // pred_region
          %s388 = sand.u32 %s99, 1
          %s389 = scalar_lea.sflag [#allocation5], %s388
          %s390 = sand.u32 %s99, 1
          %s391 = smul.addr %s390, 4
          %s392 = scalar_lea.vmem [#allocation8], %s391
          %393 = dma.done %s389, 64
        $region60: #{tpu_custom_call.1} parent=55 // pred_fallthru
          _
        // Predicated region
        $region61: #{tpu_custom_call.1} parent=55 // pred_check
          %p394 = pneg %p140
        $region62: #{tpu_custom_call.1} parent=55 // pred_check_branch
          %396 = sbr.rel (%p394) target = $region64
        $region63: #{tpu_custom_call.1} parent=55 // pred_region
          %p397 = scmp.lt.s32.totalorder %s30, 1
          %s398 = scalar_select %p397, %s30, 1
          %s399 = scalar_lea.vmem %s3, %s398
        $region64: #{tpu_custom_call.1} parent=55 // pred_fallthru
          _
      $region56: #{tpu_custom_call.1} parent=5 // pred_fallthru
        _
    $region6: #{tpu_custom_call.1} parent=1 // loop_footer
      %s23 = sadd.s32 1, %s19
    $region7: #{tpu_custom_call.1} parent=1 // loop_footer_branch
      %18 = sbr.rel target = $region3
    $region8: #{tpu_custom_call.1} parent=1 // loop_exit
      _
    %400 = vsyncpa [#allocation4], 1
    %s401 = scalar_lea.sflag [#allocation4], 1
    %402 = vsyncpa %s401, 1
    %403 = vsyncpa [#allocation7], 1
    %s404 = scalar_lea.sflag [#allocation7], 1
    %405 = vsyncpa %s404, 1
    %406 = vsyncpa [#allocation5], 1
    %s407 = scalar_lea.sflag [#allocation5], 1
    %408 = vsyncpa %s407, 1

</llo_original>
